<compile_context>
chip_gen: v7x
topology: tpu7x:2x2x1
jax: 0.10.0
libtpu: 0.0.40
codegen_flags: <defaults>
</compile_context>

<pallas_src>
import functools

import jax
import jax.numpy as jnp
from jax.experimental import pallas as pl
from jax.experimental.pallas import tpu as pltpu


# ---------------------------------------------------------------------------
# Tile selection helpers
# ---------------------------------------------------------------------------
def _largest_tile(extent, quantum, cap):
    """Largest divisor of `extent` that is a multiple of `quantum` and <= cap.

    Returns None if no such divisor exists.
    """
    best = None
    d = quantum
    limit = min(extent, cap)
    while d <= limit:
        if extent % d == 0:
            best = d
        d += quantum
    return best


def _pick_tiles(C, HW, itemsize, target_bytes):
    """Pick (c_tile, hw_tile) for streaming (C, HW) planes through VMEM."""
    # Lane axis (HW): multiple of 128 dividing HW, else the full extent
    # (block last dim must be a multiple of 128 or equal the full extent).
    hw_cap = max(128, target_bytes // max(1, C * itemsize))
    hw_t = _largest_tile(HW, 128, hw_cap) or HW
    # Sublane axis (C): tile further only if the (C, hw_t) block is still big.
    if C * hw_t * itemsize > target_bytes:
        c_cap = max(8, target_bytes // max(1, hw_t * itemsize))
        c_t = _largest_tile(C, 8, c_cap) or C
    else:
        c_t = C
    return c_t, hw_t


# ---------------------------------------------------------------------------
# Kernels
# ---------------------------------------------------------------------------
def _pool_gate_kernel(x_ref, w1t_ref, w2_ref, g_ref, *, inv_hw):
    # x_ref:   (1, C, HW_t)  native dtype, current spatial tile of image n
    # w1t_ref: (C, Cr)       fc1 weight transposed (1x1 conv, no bias), f32
    # w2_ref:  (C, Cr)       fc2 weight (1x1 conv, no bias), f32
    # g_ref:   (1, C, 1)     f32 output block, resident across the HW axis:
    #                        running per-channel sum -> final sigmoid gate
    t = pl.program_id(1)

    @pl.when(t == 0)
    def _init():
        g_ref[...] = jnp.zeros_like(g_ref)

    xb = x_ref[0].astype(jnp.float32)                          # (C, HW_t)
    g_ref[0] = g_ref[0] + jnp.sum(xb, axis=-1, keepdims=True)  # (C, 1)

    @pl.when(t == pl.num_programs(1) - 1)
    def _finalize():
        s = g_ref[0] * inv_hw                                   # (C, 1) global mean
        # fc1 + ReLU: h[r] = relu(sum_c w1[r, c] * s[c])  -> row (1, Cr)
        h = jnp.maximum(
            jnp.sum(w1t_ref[...] * s, axis=0, keepdims=True), 0.0)
        # fc2: a[c] = sum_r w2[c, r] * h[r]                 -> col (C, 1)
        a = jnp.sum(w2_ref[...] * h, axis=1, keepdims=True)
        g_ref[0] = jax.nn.sigmoid(a)


def _scale_kernel(x_ref, g_ref, o_ref):
    # x_ref/o_ref: (1, C_t, HW_t) native dtype; g_ref: (1, C_t, 1) f32
    xb = x_ref[0].astype(jnp.float32)
    o_ref[0] = (xb * g_ref[0]).astype(o_ref.dtype)  # gate broadcasts over lanes


# ---------------------------------------------------------------------------
# Wrapper
# ---------------------------------------------------------------------------
def se_module(x_nchw, w1, w2, *, block_bytes=2 * 1024 * 1024):
    """SE forward.  x_nchw: (N, C, H, W); w1: (C//r, C); w2: (C, C//r).

    Returns (N, C, H, W) in the same dtype as x_nchw.
    """
    N, C, H, W = x_nchw.shape
    Cr = w1.shape[0]
    HW = H * W
    x = x_nchw.reshape(N, C, HW)  # contiguous reshape, native dtype (no copy)
    itemsize = x.dtype.itemsize

    c_t, hw_t = _pick_tiles(C, HW, itemsize, block_bytes)
    # Pool pass keeps the full channel extent resident (the gate mixes all
    # channels); only the spatial axis is tiled there.
    hw_tp = hw_t

    w1t_f = w1.astype(jnp.float32).T   # (C, Cr)
    w2_f = w2.astype(jnp.float32)      # (C, Cr)

    vmem_limit = 48 * 1024 * 1024  # fits v5e/v6e and v7x's 64 MiB physical VMEM

    # ---- pass 1: global average pool + fc1/ReLU/fc2/sigmoid gate ----------
    gate = pl.pallas_call(
        functools.partial(_pool_gate_kernel, inv_hw=1.0 / float(HW)),
        out_shape=jax.ShapeDtypeStruct((N, C, 1), jnp.float32),
        grid_spec=pltpu.PrefetchScalarGridSpec(
            num_scalar_prefetch=0,
            grid=(N, HW // hw_tp),
            in_specs=[
                pl.BlockSpec((1, C, hw_tp), lambda n, t: (n, 0, t)),
                pl.BlockSpec((C, Cr), lambda n, t: (0, 0)),
                pl.BlockSpec((C, Cr), lambda n, t: (0, 0)),
            ],
            out_specs=pl.BlockSpec((1, C, 1), lambda n, t: (n, 0, 0)),
        ),
        compiler_params=pltpu.CompilerParams(
            dimension_semantics=("parallel", "arbitrary"),
            vmem_limit_bytes=vmem_limit,
        ),
    )(x, w1t_f, w2_f)

    # ---- pass 2: channel-wise rescale (pure streaming multiply) -----------
    out = pl.pallas_call(
        _scale_kernel,
        out_shape=jax.ShapeDtypeStruct((N, C, HW), x.dtype),
        grid_spec=pltpu.PrefetchScalarGridSpec(
            num_scalar_prefetch=0,
            grid=(N, C // c_t, HW // hw_t),
            in_specs=[
                pl.BlockSpec((1, c_t, hw_t), lambda n, c, h: (n, c, h)),
                pl.BlockSpec((1, c_t, 1), lambda n, c, h: (n, c, 0)),
            ],
            out_specs=pl.BlockSpec((1, c_t, hw_t), lambda n, c, h: (n, c, h)),
        ),
        compiler_params=pltpu.CompilerParams(
            dimension_semantics=("parallel", "parallel", "parallel"),
            vmem_limit_bytes=vmem_limit,
        ),
    )(x, gate)

    return out.reshape(N, C, H, W)


# ---------------------------------------------------------------------------
# Plain-JAX reference (identical semantics to the PyTorch module)
# ---------------------------------------------------------------------------
def _reference(x, w1, w2):
    s = jnp.mean(x, axis=(2, 3), keepdims=True)              # (N, C, 1, 1)
    h = jnp.maximum(jnp.einsum("rc,nchw->nrhw", w1, s), 0.0)
    a = jax.nn.sigmoid(jnp.einsum("cr,nrhw->nchw", w2, h))
    return x * a


if __name__ == "__main__":
    key = jax.random.PRNGKey(0)
    N, C, H, W = 2, 4, 16, 16
    reduction = 2
    Cr = C // reduction

    k1, k2, k3 = jax.random.split(key, 3)
    x = jax.random.normal(k1, (N, C, H, W), dtype=jnp.float32)
    # Conv2d 1x1 with bias=False -> plain matrices
    w1 = jax.random.normal(k2, (Cr, C), dtype=jnp.float32) * 0.1  # fc1: (Cr, C)
    w2 = jax.random.normal(k3, (C, Cr), dtype=jnp.float32) * 0.1  # fc2: (C, Cr)

    # Small block budget so the demo shapes exercise the tiled/accumulating path.
    out = se_module(x, w1, w2, block_bytes=1024)
    jax.block_until_ready(out)
    assert out.dtype == x.dtype
    ref = _reference(x, w1, w2)
    assert jnp.allclose(out, ref, atol=1e-5, rtol=1e-5), "f32 mismatch vs reference"

    # Native bf16 I/O path (gate math stays f32 inside the kernel).
    x_bf = x.astype(jnp.bfloat16)
    out_bf = se_module(x_bf, w1, w2, block_bytes=1024)
    jax.block_until_ready(out_bf)
    assert out_bf.dtype == jnp.bfloat16
    ref_bf = _reference(x_bf.astype(jnp.float32), w1, w2)
    assert jnp.allclose(out_bf.astype(jnp.float32), ref_bf, atol=5e-2, rtol=5e-2), \
        "bf16 mismatch vs reference"

    print("KERNEL_OK")
</pallas_src>

<mosaic_0001>
module attributes {stable_mosaic.version = 11 : i64} {
  func.func @_pool_gate_kernel(%arg0: i32, %arg1: i32, %arg2: memref<1x4x128xf32, #tpu.memory_space<vmem>>, %arg3: memref<4x2xf32, #tpu.memory_space<vmem>>, %arg4: memref<4x2xf32, #tpu.memory_space<vmem>>, %arg5: memref<1x4x1xf32, #tpu.memory_space<vmem>>) attributes {dimension_semantics = [#tpu.dimension_semantics<parallel>, #tpu.dimension_semantics<arbitrary>], iteration_bounds = array<i64: 2, 2>, scalar_prefetch = 0 : i64, scratch_operands = 0 : i64, tpu.core_type = #tpu.core_type<tc>, window_params = [{transform_indices = @transform_0, window_bounds = array<i64: 1, 4, 128>}, {pipeline_mode = #tpu.pipeline_mode<synchronous>, transform_indices = @transform_1, window_bounds = array<i64: 4, 2>}, {pipeline_mode = #tpu.pipeline_mode<synchronous>, transform_indices = @transform_2, window_bounds = array<i64: 4, 2>}, {transform_indices = @transform_3, window_bounds = array<i64: 1, 4, 1>}]} {
    %c0_i32 = arith.constant 0 : i32
    %0 = arith.cmpi eq, %arg1, %c0_i32 : i32
    %1 = arith.extui %0 : i1 to i32
    %c0_i32_0 = arith.constant 0 : i32
    %2 = arith.cmpi ne, %1, %c0_i32_0 : i32
    scf.if %2 {
      %cst_10 = arith.constant 0.000000e+00 : f32
      %16 = vector.broadcast %cst_10 : f32 to vector<1x4x1xf32>
      %c0_11 = arith.constant 0 : index
      %c0_12 = arith.constant 0 : index
      %c0_13 = arith.constant 0 : index
      %17 = vector.load %arg5[%c0_11, %c0_12, %c0_13] : memref<1x4x1xf32, #tpu.memory_space<vmem>>, vector<1x4x1xf32>
      tpu.vector_store %arg5[%c0_11, %c0_12, %c0_13], %16 {strides = array<i32>} : memref<1x4x1xf32, #tpu.memory_space<vmem>>, vector<1x4x1xf32>,
    } else {
    }
    %c0 = arith.constant 0 : index
    %c0_1 = arith.constant 0 : index
    %c0_2 = arith.constant 0 : index
    %3 = vector.load %arg2[%c0, %c0_1, %c0_2] : memref<1x4x128xf32, #tpu.memory_space<vmem>>, vector<1x4x128xf32>
    %4 = vector.shape_cast %3 : vector<1x4x128xf32> to vector<4x128xf32>
    %c0_3 = arith.constant 0 : index
    %c0_4 = arith.constant 0 : index
    %c0_5 = arith.constant 0 : index
    %5 = vector.load %arg5[%c0_3, %c0_4, %c0_5] : memref<1x4x1xf32, #tpu.memory_space<vmem>>, vector<1x4x1xf32>
    %6 = vector.shape_cast %5 : vector<1x4x1xf32> to vector<4x1xf32>
    %cst = arith.constant dense<0.000000e+00> : vector<4xf32>
    %7 = vector.multi_reduction <add>, %4, %cst [1] : vector<4x128xf32> to vector<4xf32>
    %8 = vector.shape_cast %7 : vector<4xf32> to vector<4x1xf32>
    %9 = arith.addf %6, %8 : vector<4x1xf32>
    %c0_6 = arith.constant 0 : index
    %c0_7 = arith.constant 0 : index
    %c0_8 = arith.constant 0 : index
    %10 = vector.load %arg5[%c0_6, %c0_7, %c0_8] : memref<1x4x1xf32, #tpu.memory_space<vmem>>, vector<1x4x1xf32>
    %11 = vector.shape_cast %10 : vector<1x4x1xf32> to vector<4x1xf32>
    %12 = vector.shape_cast %9 : vector<4x1xf32> to vector<1x4x1xf32>
    tpu.vector_store %arg5[%c0_6, %c0_7, %c0_8], %12 {strides = array<i32>} : memref<1x4x1xf32, #tpu.memory_space<vmem>>, vector<1x4x1xf32>,
    %c1_i32 = arith.constant 1 : i32
    %13 = arith.cmpi eq, %arg1, %c1_i32 : i32
    %14 = arith.extui %13 : i1 to i32
    %c0_i32_9 = arith.constant 0 : i32
    %15 = arith.cmpi ne, %14, %c0_i32_9 : i32
    scf.if %15 {
      %c0_10 = arith.constant 0 : index
      %c0_11 = arith.constant 0 : index
      %c0_12 = arith.constant 0 : index
      %16 = vector.load %arg5[%c0_10, %c0_11, %c0_12] : memref<1x4x1xf32, #tpu.memory_space<vmem>>, vector<1x4x1xf32>
      %17 = vector.shape_cast %16 : vector<1x4x1xf32> to vector<4x1xf32>
      %cst_13 = arith.constant 3.906250e-03 : f32
      %18 = vector.broadcast %cst_13 : f32 to vector<4x1xf32>
      %19 = arith.mulf %17, %18 : vector<4x1xf32>
      %c0_14 = arith.constant 0 : index
      %c0_15 = arith.constant 0 : index
      %20 = vector.load %arg3[%c0_14, %c0_15] : memref<4x2xf32, #tpu.memory_space<vmem>>, vector<4x2xf32>
      %21 = vector.broadcast %19 : vector<4x1xf32> to vector<4x2xf32>
      %22 = arith.mulf %20, %21 : vector<4x2xf32>
      %cst_16 = arith.constant dense<0.000000e+00> : vector<2xf32>
      %23 = vector.multi_reduction <add>, %22, %cst_16 [0] : vector<4x2xf32> to vector<2xf32>
      %24 = vector.shape_cast %23 : vector<2xf32> to vector<1x2xf32>
      %cst_17 = arith.constant 0.000000e+00 : f32
      %25 = vector.broadcast %cst_17 : f32 to vector<1x2xf32>
      %26 = arith.maximumf %24, %25 : vector<1x2xf32>
      %c0_18 = arith.constant 0 : index
      %c0_19 = arith.constant 0 : index
      %27 = vector.load %arg4[%c0_18, %c0_19] : memref<4x2xf32, #tpu.memory_space<vmem>>, vector<4x2xf32>
      %28 = vector.broadcast %26 : vector<1x2xf32> to vector<4x2xf32>
      %29 = arith.mulf %27, %28 : vector<4x2xf32>
      %cst_20 = arith.constant dense<0.000000e+00> : vector<4xf32>
      %30 = vector.multi_reduction <add>, %29, %cst_20 [1] : vector<4x2xf32> to vector<4xf32>
      %31 = vector.shape_cast %30 : vector<4xf32> to vector<4x1xf32>
      %32 = arith.negf %31 : vector<4x1xf32>
      %33 = math.exp %32 : vector<4x1xf32>
      %cst_21 = arith.constant 1.000000e+00 : f32
      %34 = vector.broadcast %cst_21 : f32 to vector<4x1xf32>
      %35 = arith.addf %34, %33 : vector<4x1xf32>
      %36 = arith.divf %34, %35 : vector<4x1xf32>
      %c0_22 = arith.constant 0 : index
      %c0_23 = arith.constant 0 : index
      %c0_24 = arith.constant 0 : index
      %37 = vector.load %arg5[%c0_22, %c0_23, %c0_24] : memref<1x4x1xf32, #tpu.memory_space<vmem>>, vector<1x4x1xf32>
      %38 = vector.shape_cast %37 : vector<1x4x1xf32> to vector<4x1xf32>
      %39 = vector.shape_cast %36 : vector<4x1xf32> to vector<1x4x1xf32>
      tpu.vector_store %arg5[%c0_22, %c0_23, %c0_24], %39 {strides = array<i32>} : memref<1x4x1xf32, #tpu.memory_space<vmem>>, vector<1x4x1xf32>,
    } else {
    }
    return
  }
  func.func @transform_0(%arg0: i32, %arg1: i32) -> (i32, i32, i32) {
    %c0_i32 = arith.constant 0 : i32
    %c0_i32_0 = arith.constant 0 : i32
    return %arg0, %c0_i32, %arg1 : i32, i32, i32
  }
  func.func @transform_1(%arg0: i32, %arg1: i32) -> (i32, i32) {
    %c0_i32 = arith.constant 0 : i32
    %c0_i32_0 = arith.constant 0 : i32
    %c0_i32_1 = arith.constant 0 : i32
    return %c0_i32, %c0_i32_0 : i32, i32
  }
  func.func @transform_2(%arg0: i32, %arg1: i32) -> (i32, i32) {
    %c0_i32 = arith.constant 0 : i32
    %c0_i32_0 = arith.constant 0 : i32
    %c0_i32_1 = arith.constant 0 : i32
    return %c0_i32, %c0_i32_0 : i32, i32
  }
  func.func @transform_3(%arg0: i32, %arg1: i32) -> (i32, i32, i32) {
    %c0_i32 = arith.constant 0 : i32
    %c0_i32_0 = arith.constant 0 : i32
    %c0_i32_1 = arith.constant 0 : i32
    return %arg0, %c0_i32, %c0_i32_0 : i32, i32, i32
  }
}

</mosaic_0001>

<llo_original>
// kernel: tpu_custom_call.1
$region0: #{tpu_custom_call.1}
  #allocation0 [shape = 'u32[]', space=smem, size = 0x4, offset = 0x4, fixed_abs, tag = 'smem constant byte address 0x4 - core index']
  #allocation1 [shape = 'u32[144,128]{1,0:T(1,128)}', space=vmem, size = 0x12000, scoped, tag = 'internal scratch']
  %s0 = inlined_call_operand.hbm [shape: f32[2,4,256], index: 0, kind: input, shape index: {}]
  %s1 = inlined_call_operand.vmem [shape: f32[4,2], index: 1, kind: input, shape index: {}]
  %s2 = inlined_call_operand.vmem [shape: f32[4,2], index: 2, kind: input, shape index: {}]
  %s3 = inlined_call_operand.vmem [shape: f32[2,4,1], index: 3, kind: output, shape index: {}]
  %s4 = sld [smem:[#allocation0]]
  $region57: #{tpu_custom_call.1} parent=0
    _
  %s6 = ssub.s32 1, %s4
  %s7 = scalar_select 0, %s6, %s4
  $region1: #{tpu_custom_call.1} parent=0
    #allocation2 [shape = 'u8[4096]{0}', space=vmem, size = 0x1000, scoped, tag = 'input window, operand 0']
    #allocation3 [shape = 's32[2]{0}', space=sflag, size = 0x8, scoped, tag = 'scoped memory for tpu_custom_call.1']
    %8 = vsyncpa [#allocation3], 0
    %s9 = scalar_lea.sflag [#allocation3], 1
    %10 = vsyncpa %s9, 0
    loop: start=0, step=1, limit=6
    $region2: #{tpu_custom_call.1} parent=1 // loop_pre_header
      _
    $region3: #{tpu_custom_call.1} parent=1 // loop_header
      %s12 = sphi 0, %s16
      %p13 = scmp.ge.s32.totalorder %s12, 6
      %s19 = sphi 0, %s31
      %s20 = sphi 0, %s27
      %s21 = sphi 0, %s19
      %s22 = sphi 0, %s20
      %s23 = sphi 0, %s21
      %s24 = sphi 0, %s22
      %s36 = sphi 0, %s38
      %s39 = sphi 0, %s36
      %s40 = sphi 0, %s39
      %s56 = sphi 0, %s40
      %s60 = sphi 0, %s60
      %s62 = sphi 0, %s60
      %s63 = sphi 0, %s62
      %s77 = sphi 0, %s63
      %s81 = sphi 0, %s81
      %s83 = sphi 0, %s81
      %s84 = sphi 0, %s83
      %s98 = sphi 0, %s84
      %s104 = sphi 0, %s106
      %s107 = sphi 0, %s104
      %s108 = sphi 0, %s107
      %s124 = sphi 0, %s108
    $region4: #{tpu_custom_call.1} parent=1 // loop_header_branch
      %15 = sbr.rel (%p13) target = $region8
    $region5: #{tpu_custom_call.1} parent=1 // loop_body
      %s17 = ssub.s32 %s12, 1
      %s18 = ssub.s32 %s12, 2
      %s25 = sadd.s32 1, %s20
      %p26 = scmp.ge.s32.totalorder %s25, 2
      %s27 = scalar_select %p26, 0, %s25
      %s28 = sadd.s32 1, %s19
      %s29 = scalar_select %p26, %s28, %s19
      %p30 = scmp.ge.s32.totalorder %s29, 2
      %s31 = scalar_select %p30, 0, %s29
      %s32 = ssub.s32 %s19, %s31
      %s33 = ssub.s32 %s20, %s27
      %s34 = sor.u32 %s32, %s33
      %p35 = scmp.eq.s32.totalorder %s34, 0
      %s37 = sadd.s32 %s36, 1
      %s38 = scalar_select %p35, %s36, %s37
      %p41 = pneg %p35
      %p42 = scmp.eq.s32.totalorder %s12, 3
      %p43 = por %p41, %p42
      %p44 = scmp.ne.s32.totalorder %s36, %s39
      %p45 = scmp.eq.s32.totalorder %s12, 0
      %p46 = por %p44, %p45
      %p47 = scmp.ne.s32.totalorder %s36, %s39
      %p48 = scmp.eq.s32.totalorder %s17, 3
      %p49 = por %p47, %p48
      %p50 = scmp.ne.s32.totalorder %s39, %s40
      %p51 = scmp.eq.s32.totalorder %s17, 0
      %p52 = por %p50, %p51
      %p53 = scmp.ne.s32.totalorder %s39, %s40
      %p54 = scmp.eq.s32.totalorder %s18, 3
      %p55 = por %p53, %p54
      %p57 = scmp.ne.s32.totalorder %s40, %s56
      %p58 = scmp.eq.s32.totalorder %s18, 0
      %p59 = por %p57, %p58
      %s61 = sadd.s32 %s60, 1
      %p64 = scmp.eq.s32.totalorder %s12, 3
      %p65 = scmp.ne.s32.totalorder %s60, %s62
      %p66 = scmp.eq.s32.totalorder %s12, 0
      %p67 = por %p65, %p66
      %p68 = scmp.ne.s32.totalorder %s60, %s62
      %p69 = scmp.eq.s32.totalorder %s17, 3
      %p70 = por %p68, %p69
      %p71 = scmp.ne.s32.totalorder %s62, %s63
      %p72 = scmp.eq.s32.totalorder %s17, 0
      %p73 = por %p71, %p72
      %p74 = scmp.ne.s32.totalorder %s62, %s63
      %p75 = scmp.eq.s32.totalorder %s18, 3
      %p76 = por %p74, %p75
      %p78 = scmp.ne.s32.totalorder %s63, %s77
      %p79 = scmp.eq.s32.totalorder %s18, 0
      %p80 = por %p78, %p79
      %s82 = sadd.s32 %s81, 1
      %p85 = scmp.eq.s32.totalorder %s12, 3
      %p86 = scmp.ne.s32.totalorder %s81, %s83
      %p87 = scmp.eq.s32.totalorder %s12, 0
      %p88 = por %p86, %p87
      %p89 = scmp.ne.s32.totalorder %s81, %s83
      %p90 = scmp.eq.s32.totalorder %s17, 3
      %p91 = por %p89, %p90
      %p92 = scmp.ne.s32.totalorder %s83, %s84
      %p93 = scmp.eq.s32.totalorder %s17, 0
      %p94 = por %p92, %p93
      %p95 = scmp.ne.s32.totalorder %s83, %s84
      %p96 = scmp.eq.s32.totalorder %s18, 3
      %p97 = por %p95, %p96
      %p99 = scmp.ne.s32.totalorder %s84, %s98
      %p100 = scmp.eq.s32.totalorder %s18, 0
      %p101 = por %p99, %p100
      %s102 = ssub.s32 %s19, %s31
      %p103 = scmp.eq.s32.totalorder %s102, 0
      %s105 = sadd.s32 %s104, 1
      %s106 = scalar_select %p103, %s104, %s105
      %p109 = pneg %p103
      %p110 = scmp.eq.s32.totalorder %s12, 3
      %p111 = por %p109, %p110
      %p112 = scmp.ne.s32.totalorder %s104, %s107
      %p113 = scmp.eq.s32.totalorder %s12, 0
      %p114 = por %p112, %p113
      %p115 = scmp.ne.s32.totalorder %s104, %s107
      %p116 = scmp.eq.s32.totalorder %s17, 3
      %p117 = por %p115, %p116
      %p118 = scmp.ne.s32.totalorder %s107, %s108
      %p119 = scmp.eq.s32.totalorder %s17, 0
      %p120 = por %p118, %p119
      %p121 = scmp.ne.s32.totalorder %s107, %s108
      %p122 = scmp.eq.s32.totalorder %s18, 3
      %p123 = por %p121, %p122
      %p125 = scmp.ne.s32.totalorder %s108, %s124
      %p126 = scmp.eq.s32.totalorder %s18, 0
      %p127 = por %p125, %p126
      %p128 = scmp.le.s32.totalorder 1, %s12
      %p129 = scmp.lt.s32.totalorder %s12, 5
      %p130 = pnand %p128, %p129
      %p131 = pneg %p130
      // Predicated region
      $region9: #{tpu_custom_call.1} parent=5 // pred_check
        _
      $region10: #{tpu_custom_call.1} parent=5 // pred_check_branch
        %133 = sbr.rel (%p130) target = $region12
      $region11: #{tpu_custom_call.1} parent=5 // pred_region
        %s134 = ssub.s32 %s12, 1
        // Predicated region
        $region13: #{tpu_custom_call.1} parent=11 // pred_check
          %p135 = pneg %p73
        $region14: #{tpu_custom_call.1} parent=11 // pred_check_branch
          %137 = sbr.rel (%p135) target = $region16
        $region15: #{tpu_custom_call.1} parent=11 // pred_region
          _
        $region16: #{tpu_custom_call.1} parent=11 // pred_fallthru
          _
        // Predicated region
        $region17: #{tpu_custom_call.1} parent=11 // pred_check
          %p138 = pneg %p94
        $region18: #{tpu_custom_call.1} parent=11 // pred_check_branch
          %140 = sbr.rel (%p138) target = $region20
        $region19: #{tpu_custom_call.1} parent=11 // pred_region
          _
        $region20: #{tpu_custom_call.1} parent=11 // pred_fallthru
          _
      $region12: #{tpu_custom_call.1} parent=5 // pred_fallthru
        _
      %p141 = scmp.lt.s32.totalorder %s12, 4
      // Predicated region
      $region21: #{tpu_custom_call.1} parent=5 // pred_check
        %p142 = pneg %p141
      $region22: #{tpu_custom_call.1} parent=5 // pred_check_branch
        %144 = sbr.rel (%p142) target = $region24
      $region23: #{tpu_custom_call.1} parent=5 // pred_region
        // Predicated region
        $region25: #{tpu_custom_call.1} parent=23 // pred_check
          %p145 = pneg %p46
        $region26: #{tpu_custom_call.1} parent=23 // pred_check_branch
          %147 = sbr.rel (%p145) target = $region28
        $region27: #{tpu_custom_call.1} parent=23 // pred_region
          %s148 = sand.u32 %s36, 1
          %s149 = scalar_lea.sflag [#allocation3], %s148
          %s150 = sand.u32 %s36, 1
          %s151 = smul.addr %s150, 4
          %s152 = scalar_lea.vmem [#allocation2], %s151
          %s154 = ssub.s32 64, 64
          %155 = vsyncadd %s149, %s154
          %s156 = smul.addr %s19, 2
          %s157 = sadd.s32 %s20, %s156
          %s158 = smul.addr %s157, 64
          %s159 = scalar_lea.hbm %s0, %s158
          %s161 = sshll.u32 %s152, 4
          %s162 = int_to_ptr.vmem [resolvable:$true] %s161
          %164 = dma.hbm_to_vmem [thread:$0]  %s159, 64, %s162, %s149
        $region28: #{tpu_custom_call.1} parent=23 // pred_fallthru
          _
      $region24: #{tpu_custom_call.1} parent=5 // pred_fallthru
        _
      %p165 = scmp.le.s32.totalorder 1, %s12
      %p166 = scmp.lt.s32.totalorder %s12, 5
      %p167 = pnand %p165, %p166
      %p168 = pneg %p167
      // Predicated region
      $region29: #{tpu_custom_call.1} parent=5 // pred_check
        _
      $region30: #{tpu_custom_call.1} parent=5 // pred_check_branch
        %170 = sbr.rel (%p167) target = $region32
      $region31: #{tpu_custom_call.1} parent=5 // pred_region
        %s171 = ssub.s32 %s12, 1
        %s172 = sand.u32 %s39, 1
        %s173 = scalar_lea.sflag [#allocation3], %s172
        %s174 = sand.u32 %s39, 1
        %s175 = smul.addr %s174, 4
        %s176 = scalar_lea.vmem [#allocation2], %s175
        // Predicated region
        $region33: #{tpu_custom_call.1} parent=31 // pred_check
          %p177 = pneg %p52
        $region34: #{tpu_custom_call.1} parent=31 // pred_check_branch
          %179 = sbr.rel (%p177) target = $region36
        $region35: #{tpu_custom_call.1} parent=31 // pred_region
          %180 = dma.done %s173, 64
        $region36: #{tpu_custom_call.1} parent=31 // pred_fallthru
          _
        %s181 = sand.u32 %s39, 1
        %s182 = scalar_lea.sflag [#allocation3], %s181
        %s183 = sand.u32 %s39, 1
        %s184 = smul.addr %s183, 4
        %s185 = scalar_lea.vmem [#allocation2], %s184
        %p186 = pneg %p52
        %p187 = pneg %p49
        %p188 = pneg %p73
        %p189 = pneg %p70
        %p190 = pneg %p94
        %p191 = pneg %p91
        %p192 = pneg %p120
        %p193 = pneg %p117
        %p194 = scmp.lt.s32.totalorder %s21, 1
        %s195 = scalar_select %p194, %s21, 1
        %s196 = smul.addr %s195, 4
        %s197 = scalar_lea.vmem %s3, %s196
        %p198 = scmp.lt.s32.totalorder %s21, 1
        %s199 = scalar_select %p198, %s21, 1
        %s200 = smul.addr %s199, 4
        %s201 = scalar_lea.vmem %s3, %s200
        %p202 = scmp.eq.s32.totalorder %s22, 0
        // Predicated region
        $region37: #{tpu_custom_call.1} parent=31 // pred_check
          %p203 = pneg %p202
        $region38: #{tpu_custom_call.1} parent=31 // pred_check_branch
          %205 = sbr.rel (%p203) target = $region40
        $region39: #{tpu_custom_call.1} parent=31 // pred_region
          %vm206 = vcmask 3072
          %207 = vst.msk [vmem:[%s201] sm:$0xf] %vm206, 0.0
        $region40: #{tpu_custom_call.1} parent=31 // pred_fallthru
          _
        %v208 = vld [vmem:[%s176] sm:$0xf]
        %v209 = vld [vmem:[%s201] sm:$0xf]
        %vm210 = vcmask 1043456
        %v211 = vsel %vm210, %v208, 0.0
        %212 = vadd.xlane.f32.xlu0 %v211
        %v213 = vpop.xlane.xlu0 %212
        %v214 = vadd.f32 %v209, %v213
        %vm215 = vcmask 3072
        %216 = vst.msk [vmem:[%s201] sm:$0xf] %vm215, %v214
        %p217 = scmp.eq.s32.totalorder %s22, 1
        // Predicated region
        $region41: #{tpu_custom_call.1} parent=31 // pred_check
          %p218 = pneg %p217
        $region42: #{tpu_custom_call.1} parent=31 // pred_check_branch
          %220 = sbr.rel (%p218) target = $region44
        $region43: #{tpu_custom_call.1} parent=31 // pred_region
          %v221 = vld [vmem:[%s201] sm:$0xf]
          %v222 = vmul.f32 %v221, 0.00390625
          %v223 = vld [vmem:[%s1] sm:$0xf]
          %225 = vset.pattern.permute.xlu0 0
          %226 = vperm.xlu0 %225, %v222
          %v227 = vpop.permute.xlu0 %226
          %v229 = vmul.f32 %v223, %v227
          %vm230 = vcmask 11264
          %v231 = vsel %vm230, %v229, 0.0
          %v232 = vrot.slane %v231, 4
          %v233 = vadd.f32 %v231, %v232
          %v234 = vrot.slane %v233, 2
          %v235 = vadd.f32 %v233, %v234
          %v236 = vrot.slane %v235, 1
          %v237 = vadd.f32 %v235, %v236
          %v238 = vmax.f32 %v237, 0.0
          %v239 = vld [vmem:[%s2] sm:$0xf]
          %v240 = vmul.f32 %v239, %v238
          %v241 = vsel %vm230, %v240, 0.0
          %242 = vadd.xlane.f32.xlu0 %v241
          %v243 = vpop.xlane.xlu0 %242
          %v244 = vxor.u32 %v243, 2147483648
          %v245 = vmul.f32 %v244, 1.442695
          %v246 = vpow.pop %v245
          %v247 = vadd.f32 %v246, 1.0
          %v248 = vrcp.pop %v247
          %v249 = vmul.f32 1.0, %v248
          %250 = vst.msk [vmem:[%s201] sm:$0xf] %vm215, %v249
        $region44: #{tpu_custom_call.1} parent=31 // pred_fallthru
          _
        %p251 = scmp.lt.s32.totalorder %s21, 1
        %s252 = scalar_select %p251, %s21, 1
        %s253 = smul.addr %s252, 4
        %s254 = scalar_lea.vmem %s3, %s253
        // Predicated region
        $region45: #{tpu_custom_call.1} parent=31 // pred_check
          %p255 = pneg %p117
        $region46: #{tpu_custom_call.1} parent=31 // pred_check_branch
          %257 = sbr.rel (%p255) target = $region48
        $region47: #{tpu_custom_call.1} parent=31 // pred_region
          _
        $region48: #{tpu_custom_call.1} parent=31 // pred_fallthru
          _
      $region32: #{tpu_custom_call.1} parent=5 // pred_fallthru
        _
      %p258 = scmp.le.s32.totalorder 2, %s12
      // Predicated region
      $region49: #{tpu_custom_call.1} parent=5 // pred_check
        %p259 = pneg %p258
      $region50: #{tpu_custom_call.1} parent=5 // pred_check_branch
        %261 = sbr.rel (%p259) target = $region52
      $region51: #{tpu_custom_call.1} parent=5 // pred_region
        %s262 = ssub.s32 %s12, 2
        // Predicated region
        $region53: #{tpu_custom_call.1} parent=51 // pred_check
          %p263 = pneg %p123
        $region54: #{tpu_custom_call.1} parent=51 // pred_check_branch
          %265 = sbr.rel (%p263) target = $region56
        $region55: #{tpu_custom_call.1} parent=51 // pred_region
          %p266 = scmp.lt.s32.totalorder %s23, 1
          %s267 = scalar_select %p266, %s23, 1
          %s268 = smul.addr %s267, 4
          %s269 = scalar_lea.vmem %s3, %s268
        $region56: #{tpu_custom_call.1} parent=51 // pred_fallthru
          _
      $region52: #{tpu_custom_call.1} parent=5 // pred_fallthru
        _
    $region6: #{tpu_custom_call.1} parent=1 // loop_footer
      %s16 = sadd.s32 1, %s12
    $region7: #{tpu_custom_call.1} parent=1 // loop_footer_branch
      %11 = sbr.rel target = $region3
    $region8: #{tpu_custom_call.1} parent=1 // loop_exit
      _
    %270 = vsyncpa [#allocation3], 1
    %s271 = scalar_lea.sflag [#allocation3], 1
    %272 = vsyncpa %s271, 1

</llo_original>
